<compile_context>
chip_gen: v7x
topology: tpu7x:2x2x1
jax: 0.10.0
libtpu: 0.0.40
codegen_flags: <defaults>
</compile_context>

<pallas_src>
import jax
import jax.numpy as jnp
from jax.experimental import pallas as pl
from jax.experimental.pallas import tpu as pltpu


def _modulation_kernel(x_ref, w_ref, b_ref, o_ref):
    # x_ref / o_ref: (tm, tl) lane-dense tile.
    # w_ref / b_ref: (tm, 1) per-row scale / shift, broadcast along lanes.
    o_ref[...] = x_ref[...] * w_ref[...] + b_ref[...]


def _cdiv(a, b):
    return -(-a // b)


def _round_up(x, m):
    return _cdiv(x, m) * m


def _vmem_capacity_bytes():
    try:
        return int(pltpu.get_tpu_info().vmem_capacity_bytes)
    except Exception:
        return 64 << 20  # conservative (v7x-sized) fallback


def channel_modulation(x, weight, bias, *, force_pallas=False, donate_input=False):
    """x: (N, C, H, W); weight/bias: (C,).  Returns x * weight[c] + bias[c]."""
    N, C, H, W = x.shape
    dtype = x.dtype
    M = N * C              # rows  = (n, c) pairs
    L = H * W              # lanes = pixels (contiguous fast axis)
    itemsize = jnp.dtype(dtype).itemsize

    # Small-shape escape hatch: for tiny feature maps XLA's fused elementwise
    # is already at roofline; launch overhead + masked lane stores dominate.
    if not force_pallas and (L < 512 or M * L * itemsize < (1 << 20)):
        w = weight.astype(dtype)[None, :, None, None]
        b = bias.astype(dtype)[None, :, None, None]
        return x * w + b

    # Free contiguous reshape; no NCHW<->NHWC transposes.
    x2 = x.reshape(M, L)
    # Row r of x2 corresponds to channel r % C.
    row_w = jnp.tile(weight.astype(dtype), N).reshape(M, 1)
    row_b = jnp.tile(bias.astype(dtype), N).reshape(M, 1)

    # ---- chip-aware tile budget ---------------------------------------------
    # v5e/v6e: 128 MiB VMEM -> ~8 MiB tiles; v7x: 64 MiB -> ~4 MiB tiles.
    # Double-buffered (in + out) working set ~= 4x tile bytes, under the limit.
    if _vmem_capacity_bytes() >= (100 << 20):
        tile_budget, vmem_limit = 8 << 20, 64 << 20
    else:
        tile_budget, vmem_limit = 4 << 20, 32 << 20

    sublane = 8 * max(1, 4 // itemsize)   # 8 f32, 16 bf16, 32 int8/fp8
    lane = 128
    max_lanes = 32768                      # cap on single-tile lane width

    # ---- column (lane) tile ---------------------------------------------------
    L_pad = _round_up(L, lane)
    if L_pad <= max_lanes and L_pad * sublane * itemsize <= tile_budget:
        tl, tl_cost = L, L_pad             # full row: one contiguous HBM burst
    else:
        budget_lanes = max(lane, (tile_budget // (sublane * itemsize)) // lane * lane)
        tl = min(L // lane * lane, max_lanes, budget_lanes)
        tl_cost = tl

    # ---- row (sublane) tile ---------------------------------------------------
    if M <= sublane:
        tm = M                                          # equals full dim -> legal
    else:
        tm = max(sublane,
                 min(tile_budget // (tl_cost * itemsize), M) // sublane * sublane)
        # Give the parallel row axis >= 2 tiles so both v7x TensorCores get work.
        if _cdiv(M, tm) < 2:
            tm = min(tm, max(sublane, _round_up(_cdiv(M, 2), sublane)))

    grid = (_cdiv(M, tm), _cdiv(L, tl))    # ragged edges handled by Pallas masking

    out = pl.pallas_call(
        _modulation_kernel,
        out_shape=jax.ShapeDtypeStruct((M, L), dtype),
        grid=grid,
        in_specs=[
            pl.BlockSpec((tm, tl), lambda i, j: (i, j)),
            pl.BlockSpec((tm, 1), lambda i, j: (i, 0)),
            pl.BlockSpec((tm, 1), lambda i, j: (i, 0)),
        ],
        out_specs=pl.BlockSpec((tm, tl), lambda i, j: (i, j)),
        compiler_params=pltpu.CompilerParams(
            dimension_semantics=("parallel", "parallel"),
            vmem_limit_bytes=vmem_limit,
        ),
        input_output_aliases=({0: 0} if donate_input else {}),
    )(x2, row_w, row_b)

    # Pure metadata reshape back to NCHW.
    return out.reshape(N, C, H, W)


if __name__ == "__main__":
    def reference(x, w, b):
        return x * w[None, :, None, None] + b[None, :, None, None]

    # 1) Spec shape (batch=2, channels=4, 16x16), init params (ones / zeros)
    #    and random params; force the Pallas path so the kernel is exercised.
    N, C, H, W = 2, 4, 16, 16
    kx, kw, kb = jax.random.split(jax.random.PRNGKey(0), 3)
    x = jax.random.normal(kx, (N, C, H, W), dtype=jnp.float32)
    w_init = jnp.ones((C,), jnp.float32)
    b_init = jnp.zeros((C,), jnp.float32)
    w_rand = jax.random.normal(kw, (C,), jnp.float32)
    b_rand = jax.random.normal(kb, (C,), jnp.float32)

    for w, b in ((w_init, b_init), (w_rand, b_rand)):
        out = jax.block_until_ready(channel_modulation(x, w, b, force_pallas=True))
        assert out.shape == x.shape
        assert jnp.allclose(out, reference(x, w, b), atol=1e-6, rtol=1e-6)

    # Auto path (tiny shape -> fused-XLA fallback) must match too.
    out_auto = jax.block_until_ready(channel_modulation(x, w_rand, b_rand))
    assert jnp.allclose(out_auto, reference(x, w_rand, b_rand), atol=1e-6, rtol=1e-6)

    # 2) Ragged shape (rows / lanes not multiples of 8 / 128) exercising the
    #    cdiv grid with masked edge blocks and >= 2 row tiles.
    N2, C2, H2, W2 = 3, 5, 17, 23
    kx2, kw2, kb2 = jax.random.split(jax.random.PRNGKey(1), 3)
    x2 = jax.random.normal(kx2, (N2, C2, H2, W2), dtype=jnp.float32)
    w2 = jax.random.normal(kw2, (C2,), jnp.float32)
    b2 = jax.random.normal(kb2, (C2,), jnp.float32)
    out2 = jax.block_until_ready(channel_modulation(x2, w2, b2, force_pallas=True))
    assert jnp.allclose(out2, reference(x2, w2, b2), atol=1e-6, rtol=1e-6)

    print("KERNEL_OK")
</pallas_src>

<mosaic_0001>
module attributes {stable_mosaic.version = 11 : i64} {
  func.func @_modulation_kernel(%arg0: i32, %arg1: i32, %arg2: memref<8x256xf32, #tpu.memory_space<vmem>>, %arg3: memref<8x1xf32, #tpu.memory_space<vmem>>, %arg4: memref<8x1xf32, #tpu.memory_space<vmem>>, %arg5: memref<8x256xf32, #tpu.memory_space<vmem>>) attributes {dimension_semantics = [#tpu.dimension_semantics<parallel>, #tpu.dimension_semantics<parallel>], iteration_bounds = array<i64: 1, 1>, scalar_prefetch = 0 : i64, scratch_operands = 0 : i64, tpu.core_type = #tpu.core_type<tc>, window_params = [{transform_indices = @transform_0, window_bounds = array<i64: 8, 256>}, {transform_indices = @transform_1, window_bounds = array<i64: 8, 1>}, {transform_indices = @transform_2, window_bounds = array<i64: 8, 1>}, {transform_indices = @transform_3, window_bounds = array<i64: 8, 256>}]} {
    %c0 = arith.constant 0 : index
    %c0_0 = arith.constant 0 : index
    %0 = vector.load %arg2[%c0, %c0_0] : memref<8x256xf32, #tpu.memory_space<vmem>>, vector<8x256xf32>
    %c0_1 = arith.constant 0 : index
    %c0_2 = arith.constant 0 : index
    %1 = vector.load %arg3[%c0_1, %c0_2] : memref<8x1xf32, #tpu.memory_space<vmem>>, vector<8x1xf32>
    %2 = vector.broadcast %1 : vector<8x1xf32> to vector<8x256xf32>
    %3 = arith.mulf %0, %2 : vector<8x256xf32>
    %c0_3 = arith.constant 0 : index
    %c0_4 = arith.constant 0 : index
    %4 = vector.load %arg4[%c0_3, %c0_4] : memref<8x1xf32, #tpu.memory_space<vmem>>, vector<8x1xf32>
    %5 = vector.broadcast %4 : vector<8x1xf32> to vector<8x256xf32>
    %6 = arith.addf %3, %5 : vector<8x256xf32>
    %c0_5 = arith.constant 0 : index
    %c0_6 = arith.constant 0 : index
    %7 = vector.load %arg5[%c0_5, %c0_6] : memref<8x256xf32, #tpu.memory_space<vmem>>, vector<8x256xf32>
    tpu.vector_store %arg5[%c0_5, %c0_6], %6 {strides = array<i32>} : memref<8x256xf32, #tpu.memory_space<vmem>>, vector<8x256xf32>,
    return
  }
  func.func @transform_0(%arg0: i32, %arg1: i32) -> (i32, i32) {
    %c0_i32 = arith.constant 0 : i32
    return %arg0, %arg1 : i32, i32
  }
  func.func @transform_1(%arg0: i32, %arg1: i32) -> (i32, i32) {
    %c0_i32 = arith.constant 0 : i32
    %c0_i32_0 = arith.constant 0 : i32
    return %arg0, %c0_i32 : i32, i32
  }
  func.func @transform_2(%arg0: i32, %arg1: i32) -> (i32, i32) {
    %c0_i32 = arith.constant 0 : i32
    %c0_i32_0 = arith.constant 0 : i32
    return %arg0, %c0_i32 : i32, i32
  }
  func.func @transform_3(%arg0: i32, %arg1: i32) -> (i32, i32) {
    %c0_i32 = arith.constant 0 : i32
    return %arg0, %arg1 : i32, i32
  }
}

</mosaic_0001>

<llo_original>
// kernel: tpu_custom_call.1
$region0: #{tpu_custom_call.1}
  #allocation0 [shape = 'u32[]', space=smem, size = 0x4, offset = 0x4, fixed_abs, tag = 'smem constant byte address 0x4 - core index']
  #allocation1 [shape = 'u32[144,128]{1,0:T(1,128)}', space=vmem, size = 0x12000, scoped, tag = 'internal scratch']
  %s0 = inlined_call_operand.vmem [shape: f32[8,256], index: 0, kind: input, shape index: {}]
  %s1 = inlined_call_operand.vmem [shape: f32[8,1], index: 1, kind: input, shape index: {}]
  %s2 = inlined_call_operand.vmem [shape: f32[8,1], index: 2, kind: input, shape index: {}]
  %s3 = inlined_call_operand.hbm [shape: f32[8,256], index: 3, kind: output, shape index: {}]
  %s4 = sld [smem:[#allocation0]]
  $region22: #{tpu_custom_call.1} parent=0
    _
  %s6 = ssub.s32 1, %s4
  %s7 = scalar_select 0, %s6, %s4
  $region1: #{tpu_custom_call.1} parent=0
    #allocation2 [shape = 'u8[8192]{0}', space=vmem, size = 0x2000, scoped, tag = 'output window, operand 0, single buffered']
    #allocation3 [shape = 's32[1]{0}', space=sflag, size = 0x4, scoped, tag = 'scoped memory for tpu_custom_call.1']
    %8 = vsyncpa [#allocation3], 0
    // Predicated region
    $region2: #{tpu_custom_call.1} parent=1 // pred_check
      _
    $region3: #{tpu_custom_call.1} parent=1 // pred_check_branch
      %10 = sbr.rel (0) target = $region5
    $region4: #{tpu_custom_call.1} parent=1 // pred_region
      _
    $region5: #{tpu_custom_call.1} parent=1 // pred_fallthru
      _
    // Predicated region
    $region6: #{tpu_custom_call.1} parent=1 // pred_check
      _
    $region7: #{tpu_custom_call.1} parent=1 // pred_check_branch
      %12 = sbr.rel (0) target = $region9
    $region8: #{tpu_custom_call.1} parent=1 // pred_region
      _
    $region9: #{tpu_custom_call.1} parent=1 // pred_fallthru
      _
    // Predicated region
    $region10: #{tpu_custom_call.1} parent=1 // pred_check
      _
    $region11: #{tpu_custom_call.1} parent=1 // pred_check_branch
      %14 = sbr.rel (0) target = $region13
    $region12: #{tpu_custom_call.1} parent=1 // pred_region
      _
    $region13: #{tpu_custom_call.1} parent=1 // pred_fallthru
      _
    %v15 = vld [vmem:[%s0] sm:$0xff]
    %v16 = vld [vmem:[%s0 + $0x8] sm:$0xff]
    %v17 = vld [vmem:[%s1] sm:$0xff]
    %19 = vset.pattern.permute.xlu0 0
    %20 = vperm.xlu0 %19, %v17
    %v21 = vpop.permute.xlu0 %20
    %v23 = vmul.f32 %v15, %v21
    %v24 = vmul.f32 %v16, %v21
    %v25 = vld [vmem:[%s2] sm:$0xff]
    %27 = vset.pattern.permute.xlu0 0
    %28 = vperm.xlu0 %27, %v25
    %v29 = vpop.permute.xlu0 %28
    %v31 = vadd.f32 %v23, %v29
    %v32 = vadd.f32 %v24, %v29
    %33 = vst [vmem:[#allocation2] sm:$0xff] %v31
    %34 = vst [vmem:[#allocation2 + $0x8] sm:$0xff] %v32
    // Predicated region
    $region14: #{tpu_custom_call.1} parent=1 // pred_check
      _
    $region15: #{tpu_custom_call.1} parent=1 // pred_check_branch
      %36 = sbr.rel (0) target = $region17
    $region16: #{tpu_custom_call.1} parent=1 // pred_region
      %s38 = ssub.s32 256, 256
      %39 = vsyncadd [#allocation3], %s38
      %s41 = sshll.u32 [#allocation2], 4
      %s42 = int_to_ptr.vmem [resolvable:$true] %s41
      %44 = dma.vmem_to_hbm [thread:$0]  %s42, 256, %s3, [#allocation3]
    $region17: #{tpu_custom_call.1} parent=1 // pred_fallthru
      _
    // Predicated region
    $region18: #{tpu_custom_call.1} parent=1 // pred_check
      _
    $region19: #{tpu_custom_call.1} parent=1 // pred_check_branch
      %46 = sbr.rel (0) target = $region21
    $region20: #{tpu_custom_call.1} parent=1 // pred_region
      %47 = dma.done [#allocation3], 256
    $region21: #{tpu_custom_call.1} parent=1 // pred_fallthru
      _
    %48 = vsyncpa [#allocation3], 1

</llo_original>
